<compile_context>
chip_gen: v6e
topology: v6e:2x2x1
jax: 0.10.0
libtpu: 0.0.40
codegen_flags: <defaults>
</compile_context>

<pallas_src>
import functools

import jax
import jax.numpy as jnp
from jax.experimental import pallas as pl
from jax.experimental.pallas import tpu as pltpu

_MiB = 1024 * 1024


def _rmsnorm_kernel(x_ref, w_ref, o_ref, *, eps: float, inv_dim: float,
                    approx_recip: bool, low_precision_mul: bool):
    x = x_ref[...]                                           # (tm, dim), I/O dtype
    x_f32 = x.astype(jnp.float32)
    # rms = sqrt(mean(x^2)) == ||x|| / sqrt(dim); fold 1/dim into the sum.
    sumsq = jnp.sum(x_f32 * x_f32, axis=-1, keepdims=True)   # (tm, 1), f32 accum
    rms = jnp.sqrt(sumsq * jnp.float32(inv_dim))             # (tm, 1)
    # Narrow (tm, 1)-column reciprocal instead of a full-width divide.
    # approx=True (EUP slot, ~2^-12 rel err) only when storing below f32.
    inv = pl.reciprocal(rms + jnp.float32(eps), approx=approx_recip)  # (tm, 1) f32

    if low_precision_mul:
        # bf16 scale path (v6e/v7x native bf16 VPU): keeps f32 accumulation
        # above, halves VALU work and vreg/VMEM pressure on the store path.
        inv_c = inv.astype(o_ref.dtype)
        w_c = w_ref[...].astype(o_ref.dtype)
        o_ref[...] = (x.astype(o_ref.dtype) * inv_c) * w_c
    else:
        w_c = w_ref[...].astype(jnp.float32)
        o_ref[...] = ((x_f32 * inv) * w_c).astype(o_ref.dtype)


def _vmem_capacity_bytes() -> int:
    """Physical VMEM per TensorCore; conservative (v7x) fallback if unknown."""
    try:
        cap = getattr(pltpu.get_tpu_info(), "vmem_capacity_bytes", None)
        if cap:
            return int(cap)
    except Exception:
        pass
    return 64 * _MiB


def rmsnorm_pallas(x: jax.Array, weight: jax.Array, eps: float = 1e-8, *,
                   block_rows: int | None = None,
                   vmem_budget_bytes: int = 32 * _MiB,
                   max_tile_bytes: int = 8 * _MiB,
                   bf16_math: bool | None = None) -> jax.Array:
    """RMSNorm over the last axis of x. x: (..., dim), weight: (dim,)."""
    orig_shape = x.shape
    dim = orig_shape[-1]
    rows = 1
    for s in orig_shape[:-1]:
        rows *= s

    # Empty input (any zero-sized dim): nothing to compute.
    if rows == 0 or dim == 0:
        return jnp.zeros(orig_shape, dtype=x.dtype)

    x2d = x.reshape(rows, dim)
    w2d = weight.reshape(1, dim)

    itemsize = jnp.dtype(x.dtype).itemsize
    # Sublane alignment for the row axis: 8 (f32), 16 (bf16), 32 (8-bit).
    row_align = max(8, 32 // itemsize)

    if bf16_math is None:
        # Auto: low-precision multiplies only for bf16 I/O. Set False on v5e
        # (no bf16 VALU) if profiling shows it matters there.
        bf16_math = (x.dtype == jnp.bfloat16)
    approx_recip = itemsize < 4   # sub-f32 store hides the ~2^-12 rel error

    if block_rows is None:
        # Live VMEM per row: double-buffered input + output tiles (I/O dtype)
        # plus ~3 f32-sized intermediates of the tile in the body.
        bytes_per_row = dim * (4 * itemsize + 3 * 4)
        tm = min(vmem_budget_bytes // max(bytes_per_row, 1),
                 max_tile_bytes // max(dim * itemsize, 1))   # x tile <= ~8 MiB
    else:
        tm = block_rows
    tm = max(row_align, (tm // row_align) * row_align)        # align down
    rows_aligned = pl.cdiv(rows, row_align) * row_align
    tm = min(tm, rows_aligned)                                # don't exceed input
    # Ensure >= 2 grid blocks when possible so the "parallel" row axis can
    # shard across v7x's two TensorCores (near-free on single-TC v5e/v6e).
    if rows >= 2 * row_align:
        half_rows = pl.cdiv(pl.cdiv(rows, 2), row_align) * row_align
        tm = min(tm, half_rows)

    # Ragged-last-block grid: no padding, no output slice. OOB reads in the
    # final block feed garbage rows whose stores are masked; per-row math means
    # they never touch valid rows.
    n_blocks = pl.cdiv(rows, tm)

    # Scoped-VMEM limit: floor of 32 MiB (v5e's default is only 16 MiB), ceiling
    # with headroom below physical capacity (~48 MiB on v7x, <= 96 MiB on v5e/v6e).
    tile_bytes = tm * dim * itemsize
    est_vmem = 4 * tile_bytes + 3 * tm * dim * 4 + dim * 4 + 2 * _MiB
    vmem_cap = _vmem_capacity_bytes()
    vmem_ceiling = max(32 * _MiB, min(vmem_cap - 16 * _MiB, 96 * _MiB))
    vmem_limit = int(min(max(est_vmem, 32 * _MiB), vmem_ceiling))

    out = pl.pallas_call(
        functools.partial(_rmsnorm_kernel, eps=float(eps), inv_dim=1.0 / dim,
                          approx_recip=approx_recip, low_precision_mul=bf16_math),
        out_shape=jax.ShapeDtypeStruct((rows, dim), x.dtype),
        grid_spec=pltpu.PrefetchScalarGridSpec(
            num_scalar_prefetch=0,
            grid=(n_blocks,),
            in_specs=[
                pl.BlockSpec((tm, dim), lambda i: (i, 0)),   # x tile
                pl.BlockSpec((1, dim), lambda i: (0, 0)),    # weight (resident)
            ],
            out_specs=pl.BlockSpec((tm, dim), lambda i: (i, 0)),
        ),
        compiler_params=pltpu.CompilerParams(
            dimension_semantics=("parallel",),   # row axis shards across TCs (v7x)
            vmem_limit_bytes=vmem_limit,
        ),
    )(x2d, w2d)

    return out.reshape(orig_shape)


def rmsnorm_ref(x, weight, eps=1e-8):
    rms = jnp.linalg.norm(x, axis=-1, keepdims=True) / jnp.sqrt(x.shape[-1])
    return weight * (x / (rms + eps))


if __name__ == "__main__":
    key = jax.random.PRNGKey(0)
    kx, kw, kx2 = jax.random.split(key, 3)

    batch, seq, dim = 2, 8, 32
    x = jax.random.normal(kx, (batch, seq, dim), dtype=jnp.float32)
    # Module __init__ sets weight = ones(dim); perturb deterministically so the
    # broadcast path is actually exercised.
    weight = jnp.ones((dim,), dtype=jnp.float32) + 0.01 * jax.random.normal(
        kw, (dim,), dtype=jnp.float32)

    out = rmsnorm_pallas(x, weight, eps=1e-8)
    out = jax.block_until_ready(out)
    ref = rmsnorm_ref(x, weight, eps=1e-8)
    assert out.shape == x.shape
    assert jnp.allclose(out, ref, atol=1e-5, rtol=1e-5), "mismatch vs reference"

    # Second check: row count (15) not a multiple of the tile -> exercises the
    # ragged last block (masked stores, no padding copy).
    x2 = jax.random.normal(kx2, (3, 5, dim), dtype=jnp.float32)
    out2 = jax.block_until_ready(rmsnorm_pallas(x2, weight, eps=1e-8))
    ref2 = rmsnorm_ref(x2, weight, eps=1e-8)
    assert out2.shape == x2.shape
    assert jnp.allclose(out2, ref2, atol=1e-5, rtol=1e-5), "mismatch (ragged path)"

    print("KERNEL_OK")
</pallas_src>

<mosaic_0001>
module attributes {stable_mosaic.version = 11 : i64} {
  func.func @_rmsnorm_kernel(%arg0: i32, %arg1: memref<8x32xf32, #tpu.memory_space<vmem>>, %arg2: memref<1x32xf32, #tpu.memory_space<vmem>>, %arg3: memref<8x32xf32, #tpu.memory_space<vmem>>) attributes {dimension_semantics = [#tpu.dimension_semantics<parallel>], iteration_bounds = array<i64: 2>, scalar_prefetch = 0 : i64, scratch_operands = 0 : i64, tpu.core_type = #tpu.core_type<tc>, window_params = [{transform_indices = @transform_0, window_bounds = array<i64: 8, 32>}, {pipeline_mode = #tpu.pipeline_mode<synchronous>, transform_indices = @transform_1, window_bounds = array<i64: 1, 32>}, {transform_indices = @transform_2, window_bounds = array<i64: 8, 32>}]} {
    %c0 = arith.constant 0 : index
    %c0_0 = arith.constant 0 : index
    %0 = vector.load %arg1[%c0, %c0_0] : memref<8x32xf32, #tpu.memory_space<vmem>>, vector<8x32xf32>
    %1 = arith.mulf %0, %0 : vector<8x32xf32>
    %cst = arith.constant dense<0.000000e+00> : vector<8xf32>
    %2 = vector.multi_reduction <add>, %1, %cst [1] : vector<8x32xf32> to vector<8xf32>
    %3 = vector.shape_cast %2 : vector<8xf32> to vector<8x1xf32>
    %cst_1 = arith.constant 3.125000e-02 : f32
    %4 = vector.broadcast %cst_1 : f32 to vector<8x1xf32>
    %5 = arith.mulf %3, %4 : vector<8x1xf32>
    %6 = math.sqrt %5 : vector<8x1xf32>
    %cst_2 = arith.constant 9.99999993E-9 : f32
    %7 = vector.broadcast %cst_2 : f32 to vector<8x1xf32>
    %8 = arith.addf %6, %7 : vector<8x1xf32>
    %9 = tpu.reciprocal %8 : vector<8x1xf32> -> vector<8x1xf32>
    %c0_3 = arith.constant 0 : index
    %c0_4 = arith.constant 0 : index
    %10 = vector.load %arg2[%c0_3, %c0_4] : memref<1x32xf32, #tpu.memory_space<vmem>>, vector<1x32xf32>
    %11 = vector.broadcast %9 : vector<8x1xf32> to vector<8x32xf32>
    %12 = arith.mulf %0, %11 : vector<8x32xf32>
    %13 = vector.broadcast %10 : vector<1x32xf32> to vector<8x32xf32>
    %14 = arith.mulf %12, %13 : vector<8x32xf32>
    %c0_5 = arith.constant 0 : index
    %c0_6 = arith.constant 0 : index
    %15 = vector.load %arg3[%c0_5, %c0_6] : memref<8x32xf32, #tpu.memory_space<vmem>>, vector<8x32xf32>
    tpu.vector_store %arg3[%c0_5, %c0_6], %14 {strides = array<i32>} : memref<8x32xf32, #tpu.memory_space<vmem>>, vector<8x32xf32>,
    return
  }
  func.func @transform_0(%arg0: i32) -> (i32, i32) {
    %c0_i32 = arith.constant 0 : i32
    %c0_i32_0 = arith.constant 0 : i32
    return %arg0, %c0_i32 : i32, i32
  }
  func.func @transform_1(%arg0: i32) -> (i32, i32) {
    %c0_i32 = arith.constant 0 : i32
    %c0_i32_0 = arith.constant 0 : i32
    %c0_i32_1 = arith.constant 0 : i32
    return %c0_i32, %c0_i32_0 : i32, i32
  }
  func.func @transform_2(%arg0: i32) -> (i32, i32) {
    %c0_i32 = arith.constant 0 : i32
    %c0_i32_0 = arith.constant 0 : i32
    return %arg0, %c0_i32 : i32, i32
  }
}

</mosaic_0001>

<llo_original>
// kernel: tpu_custom_call.1
$region0: #{tpu_custom_call.1}
  #allocation0 [shape = 'u32[]', space=smem, size = 0x4, offset = 0x4, fixed_abs, tag = 'smem constant byte address 0x4 - core index']
  #allocation1 [shape = 'u32[144,128]{1,0:T(1,128)}', space=vmem, size = 0x12000, scoped, tag = 'internal scratch']
  %s0 = inlined_call_operand.hbm [shape: f32[16,32], index: 0, kind: input, shape index: {}]
  %s1 = inlined_call_operand.vmem [shape: f32[1,32], index: 1, kind: input, shape index: {}]
  %s2 = inlined_call_operand.hbm [shape: f32[16,32], index: 2, kind: output, shape index: {}]
  %s3 = sld [smem:[#allocation0]]
  $region45: #{tpu_custom_call.1} parent=0
    _
  %s5 = ssub.s32 1, %s3
  %s6 = scalar_select 0, %s5, %s3
  $region1: #{tpu_custom_call.1} parent=0
    #allocation2 [shape = 'u8[8192]{0}', space=vmem, size = 0x2000, scoped, tag = 'input window, operand 0']
    #allocation3 [shape = 's32[2]{0}', space=sflag, size = 0x8, scoped, tag = 'scoped memory for tpu_custom_call.1']
    #allocation4 [shape = 's32[2]{0}', space=sflag, size = 0x8, scoped, tag = 'scoped memory for tpu_custom_call.1']
    #allocation5 [shape = 'u8[8192]{0}', space=vmem, size = 0x2000, scoped, tag = 'output window, operand 0']
    %7 = vsyncpa [#allocation3], 0
    %s8 = scalar_lea.sflag [#allocation3], 1
    %9 = vsyncpa %s8, 0
    %10 = vsyncpa [#allocation4], 0
    %s11 = scalar_lea.sflag [#allocation4], 1
    %12 = vsyncpa %s11, 0
    loop: start=0, step=1, limit=4
    $region2: #{tpu_custom_call.1} parent=1 // loop_pre_header
      _
    $region3: #{tpu_custom_call.1} parent=1 // loop_header
      %s14 = sphi 0, %s18
      %p15 = scmp.ge.s32.totalorder %s14, 4
      %s24 = sphi 0, %s26
      %s27 = sphi 0, %s24
      %s28 = sphi 0, %s27
      %s44 = sphi 0, %s28
      %s48 = sphi 0, %s48
      %s50 = sphi 0, %s48
      %s51 = sphi 0, %s50
      %s65 = sphi 0, %s51
      %s71 = sphi 0, %s73
      %s74 = sphi 0, %s71
      %s75 = sphi 0, %s74
      %s91 = sphi 0, %s75
    $region4: #{tpu_custom_call.1} parent=1 // loop_header_branch
      %17 = sbr.rel (%p15) target = $region8
    $region5: #{tpu_custom_call.1} parent=1 // loop_body
      %s19 = ssub.s32 %s14, 1
      %s20 = ssub.s32 %s14, 2
      %s21 = sadd.s32 %s14, 1
      %s22 = ssub.s32 %s14, %s21
      %p23 = scmp.eq.s32.totalorder %s22, 0
      %s25 = sadd.s32 %s24, 1
      %s26 = scalar_select %p23, %s24, %s25
      %p29 = pneg %p23
      %p30 = scmp.eq.s32.totalorder %s14, 1
      %p31 = por %p29, %p30
      %p32 = scmp.ne.s32.totalorder %s24, %s27
      %p33 = scmp.eq.s32.totalorder %s14, 0
      %p34 = por %p32, %p33
      %p35 = scmp.ne.s32.totalorder %s24, %s27
      %p36 = scmp.eq.s32.totalorder %s19, 1
      %p37 = por %p35, %p36
      %p38 = scmp.ne.s32.totalorder %s27, %s28
      %p39 = scmp.eq.s32.totalorder %s19, 0
      %p40 = por %p38, %p39
      %p41 = scmp.ne.s32.totalorder %s27, %s28
      %p42 = scmp.eq.s32.totalorder %s20, 1
      %p43 = por %p41, %p42
      %p45 = scmp.ne.s32.totalorder %s28, %s44
      %p46 = scmp.eq.s32.totalorder %s20, 0
      %p47 = por %p45, %p46
      %s49 = sadd.s32 %s48, 1
      %p52 = scmp.eq.s32.totalorder %s14, 1
      %p53 = scmp.ne.s32.totalorder %s48, %s50
      %p54 = scmp.eq.s32.totalorder %s14, 0
      %p55 = por %p53, %p54
      %p56 = scmp.ne.s32.totalorder %s48, %s50
      %p57 = scmp.eq.s32.totalorder %s19, 1
      %p58 = por %p56, %p57
      %p59 = scmp.ne.s32.totalorder %s50, %s51
      %p60 = scmp.eq.s32.totalorder %s19, 0
      %p61 = por %p59, %p60
      %p62 = scmp.ne.s32.totalorder %s50, %s51
      %p63 = scmp.eq.s32.totalorder %s20, 1
      %p64 = por %p62, %p63
      %p66 = scmp.ne.s32.totalorder %s51, %s65
      %p67 = scmp.eq.s32.totalorder %s20, 0
      %p68 = por %p66, %p67
      %s69 = ssub.s32 %s14, %s21
      %p70 = scmp.eq.s32.totalorder %s69, 0
      %s72 = sadd.s32 %s71, 1
      %s73 = scalar_select %p70, %s71, %s72
      %p76 = pneg %p70
      %p77 = scmp.eq.s32.totalorder %s14, 1
      %p78 = por %p76, %p77
      %p79 = scmp.ne.s32.totalorder %s71, %s74
      %p80 = scmp.eq.s32.totalorder %s14, 0
      %p81 = por %p79, %p80
      %p82 = scmp.ne.s32.totalorder %s71, %s74
      %p83 = scmp.eq.s32.totalorder %s19, 1
      %p84 = por %p82, %p83
      %p85 = scmp.ne.s32.totalorder %s74, %s75
      %p86 = scmp.eq.s32.totalorder %s19, 0
      %p87 = por %p85, %p86
      %p88 = scmp.ne.s32.totalorder %s74, %s75
      %p89 = scmp.eq.s32.totalorder %s20, 1
      %p90 = por %p88, %p89
      %p92 = scmp.ne.s32.totalorder %s75, %s91
      %p93 = scmp.eq.s32.totalorder %s20, 0
      %p94 = por %p92, %p93
      %p95 = scmp.le.s32.totalorder 1, %s14
      %p96 = scmp.lt.s32.totalorder %s14, 3
      %p97 = pnand %p95, %p96
      %p98 = pneg %p97
      // Predicated region
      $region9: #{tpu_custom_call.1} parent=5 // pred_check
        _
      $region10: #{tpu_custom_call.1} parent=5 // pred_check_branch
        %100 = sbr.rel (%p97) target = $region12
      $region11: #{tpu_custom_call.1} parent=5 // pred_region
        %s101 = ssub.s32 %s14, 1
        // Predicated region
        $region13: #{tpu_custom_call.1} parent=11 // pred_check
          %p102 = pneg %p61
        $region14: #{tpu_custom_call.1} parent=11 // pred_check_branch
          %104 = sbr.rel (%p102) target = $region16
        $region15: #{tpu_custom_call.1} parent=11 // pred_region
          _
        $region16: #{tpu_custom_call.1} parent=11 // pred_fallthru
          _
      $region12: #{tpu_custom_call.1} parent=5 // pred_fallthru
        _
      %p105 = scmp.lt.s32.totalorder %s14, 2
      // Predicated region
      $region17: #{tpu_custom_call.1} parent=5 // pred_check
        %p106 = pneg %p105
      $region18: #{tpu_custom_call.1} parent=5 // pred_check_branch
        %108 = sbr.rel (%p106) target = $region20
      $region19: #{tpu_custom_call.1} parent=5 // pred_region
        // Predicated region
        $region21: #{tpu_custom_call.1} parent=19 // pred_check
          %p109 = pneg %p34
        $region22: #{tpu_custom_call.1} parent=19 // pred_check_branch
          %111 = sbr.rel (%p109) target = $region24
        $region23: #{tpu_custom_call.1} parent=19 // pred_region
          %s112 = sand.u32 %s24, 1
          %s113 = scalar_lea.sflag [#allocation3], %s112
          %s114 = sand.u32 %s24, 1
          %s115 = smul.addr %s114, 8
          %s116 = scalar_lea.vmem [#allocation2], %s115
          %s118 = ssub.s32 128, 128
          %119 = vsyncadd %s113, %s118
          %s120 = smul.addr %s14, 128
          %s121 = scalar_lea.hbm %s0, %s120
          %s123 = sshll.u32 %s116, 4
          %s124 = int_to_ptr.vmem [resolvable:$true] %s123
          %126 = dma.hbm_to_vmem [thread:$0]  %s121, 128, %s124, %s113
        $region24: #{tpu_custom_call.1} parent=19 // pred_fallthru
          _
      $region20: #{tpu_custom_call.1} parent=5 // pred_fallthru
        _
      %p127 = scmp.le.s32.totalorder 1, %s14
      %p128 = scmp.lt.s32.totalorder %s14, 3
      %p129 = pnand %p127, %p128
      %p130 = pneg %p129
      // Predicated region
      $region25: #{tpu_custom_call.1} parent=5 // pred_check
        _
      $region26: #{tpu_custom_call.1} parent=5 // pred_check_branch
        %132 = sbr.rel (%p129) target = $region28
      $region27: #{tpu_custom_call.1} parent=5 // pred_region
        %s133 = ssub.s32 %s14, 1
        %s134 = sand.u32 %s27, 1
        %s135 = scalar_lea.sflag [#allocation3], %s134
        %s136 = sand.u32 %s27, 1
        %s137 = smul.addr %s136, 8
        %s138 = scalar_lea.vmem [#allocation2], %s137
        // Predicated region
        $region29: #{tpu_custom_call.1} parent=27 // pred_check
          %p139 = pneg %p40
        $region30: #{tpu_custom_call.1} parent=27 // pred_check_branch
          %141 = sbr.rel (%p139) target = $region32
        $region31: #{tpu_custom_call.1} parent=27 // pred_region
          %142 = dma.done %s135, 128
        $region32: #{tpu_custom_call.1} parent=27 // pred_fallthru
          _
        %s143 = sand.u32 %s27, 1
        %s144 = scalar_lea.sflag [#allocation3], %s143
        %s145 = sand.u32 %s27, 1
        %s146 = smul.addr %s145, 8
        %s147 = scalar_lea.vmem [#allocation2], %s146
        %p148 = pneg %p40
        %p149 = pneg %p37
        %p150 = pneg %p61
        %p151 = pneg %p58
        %p152 = pneg %p87
        %p153 = pneg %p84
        %s154 = sand.u32 %s74, 1
        %s155 = scalar_lea.sflag [#allocation4], %s154
        %s156 = sand.u32 %s74, 1
        %s157 = smul.addr %s156, 8
        %s158 = scalar_lea.vmem [#allocation5], %s157
        %v159 = vld [vmem:[%s138] sm:$0xff]
        %v160 = vmul.f32 %v159, %v159
        %vm161 = vcmask 261120
        %v162 = vsel %vm161, %v160, 0.0
        %163 = vadd.xlane.f32.xlu0 %v162
        %v164 = vpop.xlane.xlu0 %163
        %v165 = vmul.f32 %v164, 0.03125
        %v166 = vrsqrt.pop %v165
        %v167 = vmul.f32 %v165, %v166
        %vm168 = vcmp.eq.f32.partialorder %v165, inf
        %v169 = vsel %vm168, %v165, %v167
        %vm170 = vcmp.eq.f32.partialorder %v165, 0.0
        %v171 = vand.u32 %v165, 2147483648
        %v172 = vsel %vm170, %v171, %v169
        %v173 = vadd.f32 %v172, 1e-08
        %v174 = vrcp.pop %v173
        %v175 = vld [vmem:[%s1] sm:$0x1]
        %v176 = vmul.f32 %v159, %v174
        %v178 = vlaneseq
        %v179 = vshrl.u32 %v178, 7
        %v180 = vsub.s32 0, %v179
        %v181 = vrot.slane %v175, %v180
        %v183 = vmul.f32 %v176, %v181
        %184 = vst.msk [vmem:[%s158] sm:$0xff] %vm161, %v183
        %s185 = sand.u32 %s74, 1
        %s186 = scalar_lea.sflag [#allocation4], %s185
        %s187 = sand.u32 %s74, 1
        %s188 = smul.addr %s187, 8
        %s189 = scalar_lea.vmem [#allocation5], %s188
        // Predicated region
        $region33: #{tpu_custom_call.1} parent=27 // pred_check
          %p190 = pneg %p84
        $region34: #{tpu_custom_call.1} parent=27 // pred_check_branch
          %192 = sbr.rel (%p190) target = $region36
        $region35: #{tpu_custom_call.1} parent=27 // pred_region
          %s194 = ssub.s32 128, 128
          %195 = vsyncadd %s186, %s194
          %s196 = smul.addr %s19, 128
          %s197 = scalar_lea.hbm %s2, %s196
          %s199 = sshll.u32 %s189, 4
          %s200 = int_to_ptr.vmem [resolvable:$true] %s199
          %202 = dma.vmem_to_hbm [thread:$0]  %s200, 128, %s197, %s186
        $region36: #{tpu_custom_call.1} parent=27 // pred_fallthru
          _
      $region28: #{tpu_custom_call.1} parent=5 // pred_fallthru
        _
      %p203 = scmp.le.s32.totalorder 2, %s14
      // Predicated region
      $region37: #{tpu_custom_call.1} parent=5 // pred_check
        %p204 = pneg %p203
      $region38: #{tpu_custom_call.1} parent=5 // pred_check_branch
        %206 = sbr.rel (%p204) target = $region40
      $region39: #{tpu_custom_call.1} parent=5 // pred_region
        %s207 = ssub.s32 %s14, 2
        // Predicated region
        $region41: #{tpu_custom_call.1} parent=39 // pred_check
          %p208 = pneg %p90
        $region42: #{tpu_custom_call.1} parent=39 // pred_check_branch
          %210 = sbr.rel (%p208) target = $region44
        $region43: #{tpu_custom_call.1} parent=39 // pred_region
          %s211 = sand.u32 %s75, 1
          %s212 = scalar_lea.sflag [#allocation4], %s211
          %s213 = sand.u32 %s75, 1
          %s214 = smul.addr %s213, 8
          %s215 = scalar_lea.vmem [#allocation5], %s214
          %216 = dma.done %s212, 128
        $region44: #{tpu_custom_call.1} parent=39 // pred_fallthru
          _
      $region40: #{tpu_custom_call.1} parent=5 // pred_fallthru
        _
    $region6: #{tpu_custom_call.1} parent=1 // loop_footer
      %s18 = sadd.s32 1, %s14
    $region7: #{tpu_custom_call.1} parent=1 // loop_footer_branch
      %13 = sbr.rel target = $region3
    $region8: #{tpu_custom_call.1} parent=1 // loop_exit
      _
    %217 = vsyncpa [#allocation3], 1
    %s218 = scalar_lea.sflag [#allocation3], 1
    %219 = vsyncpa %s218, 1
    %220 = vsyncpa [#allocation4], 1
    %s221 = scalar_lea.sflag [#allocation4], 1
    %222 = vsyncpa %s221, 1

</llo_original>
